<compile_context>
chip_gen: v7x
topology: tpu7x:2x2x1
jax: 0.10.0
libtpu: 0.0.40
codegen_flags: <defaults>
</compile_context>

<pallas_src>
import functools

import numpy as np
import jax
import jax.numpy as jnp
from jax.experimental import pallas as pl
from jax.experimental.pallas import tpu as pltpu


def _round_up(a, b):
    return ((a + b - 1) // b) * b


# ---------------------------------------------------------------------------
# Coefficient tables (always built in float64, cached per size)
# ---------------------------------------------------------------------------

@functools.lru_cache(maxsize=32)
def _idct_matrix_np(n):
    """DCT-III transform matrix (N, N), float64 math, stored f32."""
    ns = np.arange(n).reshape(n, 1).astype(np.float64)   # frequency index n
    ks = np.arange(n).reshape(1, n).astype(np.float64)   # output index k
    mat = np.cos(np.pi * ns * (2.0 * ks + 1.0) / (2.0 * n))
    scale = np.where(ns == 0, 1.0, 2.0)                  # 1/2*x0 then *2
    return (mat * scale).astype(np.float32)


@functools.lru_cache(maxsize=32)
def _idct_packed_matrix_np(n, r):
    """Block-diagonal kron(I_r, W): r rows share one 128-lane vreg row."""
    return np.kron(np.eye(r, dtype=np.float32), _idct_matrix_np(n))


def _idct_matrix(n, dtype=jnp.float32):
    return jnp.asarray(_idct_matrix_np(n), dtype=dtype)


def _get_w(wmat, n, w_dtype):
    if (wmat is not None and getattr(wmat, "ndim", 0) == 2
            and wmat.shape == (n, n) and wmat.dtype == w_dtype):
        return wmat
    return _idct_matrix(n, dtype=w_dtype)


# ---------------------------------------------------------------------------
# Generation-aware budgets / tile defaults
# ---------------------------------------------------------------------------

@functools.lru_cache(maxsize=1)
def _physical_vmem_bytes():
    try:
        return int(pltpu.get_tpu_info().vmem_capacity_bytes)
    except Exception:
        return 64 << 20          # conservative: v7x per-TensorCore VMEM


@functools.lru_cache(maxsize=1)
def _vmem_budget():
    # Leave headroom for Mosaic internal scratch / semaphores.
    return max(24 << 20, _physical_vmem_bytes() - (12 << 20))


def _vmem_limit(need_bytes):
    return int(min(_vmem_budget(), max(32 << 20, int(need_bytes) + (8 << 20))))


@functools.lru_cache(maxsize=1)
def _default_tiles():
    # (tm, tn, tk): bigger defaults on 128 MiB-VMEM parts (v5e / v6e).
    if _physical_vmem_bytes() >= (96 << 20):
        return 512, 1024, 512
    return 256, 512, 512         # v7x (64 MiB VMEM per TensorCore)


def _split_rows(m, tm):
    """Row tile: multiple of 8, and >= 2 grid tiles when feasible so both
    v7x TensorCores get work (near-zero cost on single-TC v5e/v6e)."""
    tm = max(8, min(tm, _round_up(m, 8)))
    if pl.cdiv(m, tm) < 2 and m >= 16:
        tm = _round_up(pl.cdiv(m, 2), 8)
    return tm


# ---------------------------------------------------------------------------
# Kernels
# ---------------------------------------------------------------------------

def _matmul_kernel(x_ref, w_ref, o_ref, *, mm_dtype):
    x = x_ref[...]
    w = w_ref[...]
    if mm_dtype is not None:                 # optional reduced-precision MXU
        x = x.astype(mm_dtype)
        w = w.astype(mm_dtype)
    o_ref[...] = jnp.dot(x, w, preferred_element_type=jnp.float32).astype(o_ref.dtype)


def _matmul_acc_kernel(x_ref, w_ref, o_ref, acc_ref, *, mm_dtype):
    @pl.when(pl.program_id(2) == 0)
    def _():
        acc_ref[...] = jnp.zeros_like(acc_ref)

    x = x_ref[...]
    w = w_ref[...]
    if mm_dtype is not None:
        x = x.astype(mm_dtype)
        w = w.astype(mm_dtype)
    acc_ref[...] += jnp.dot(x, w, preferred_element_type=jnp.float32)

    @pl.when(pl.program_id(2) == pl.num_programs(2) - 1)
    def _():
        o_ref[...] = acc_ref[...].astype(o_ref.dtype)


# ---------------------------------------------------------------------------
# Resident-W (grid-constant) BlockSpec helpers
# ---------------------------------------------------------------------------

def _const_spec(single_buffer, block_shape, index_map):
    """BlockSpec for a grid-constant (resident) operand."""
    if single_buffer:
        # Constant index map => the second pipeline buffer is never filled but
        # still counts against VMEM; request single buffering.
        return pl.BlockSpec(block_shape, index_map, pipeline_mode=pl.Buffered(1))
    return pl.BlockSpec(block_shape, index_map)


def _run(build, *operands):
    """Run build(single_buffer=True); fall back to default double buffering if
    this jax/Mosaic version rejects pipeline_mode=pl.Buffered(1)."""
    try:
        return build(True)(*operands)
    except Exception:
        return build(False)(*operands)


# ---------------------------------------------------------------------------
# Paths
# ---------------------------------------------------------------------------

def _idct_resident(x2d, w, m, n, mm_dtype, tm):
    """x (m, n) @ W (n, n) with W fully resident in VMEM (single-buffered)."""
    isx = jnp.dtype(x2d.dtype).itemsize
    isw = jnp.dtype(w.dtype).itemsize
    tm = _split_rows(m, tm)
    grid = (pl.cdiv(m, tm),)
    vmem_need = 2 * isw * n * n + 4 * isx * tm * n
    cost = pl.CostEstimate(flops=2 * m * n * n, transcendentals=0,
                           bytes_accessed=isx * 2 * m * n + isw * n * n)
    kern = functools.partial(_matmul_kernel, mm_dtype=mm_dtype)

    def build(single_w):
        return pl.pallas_call(
            kern,
            out_shape=jax.ShapeDtypeStruct((m, n), x2d.dtype),
            grid_spec=pltpu.PrefetchScalarGridSpec(
                num_scalar_prefetch=0,
                grid=grid,
                in_specs=[pl.BlockSpec((tm, n), lambda i: (i, 0)),
                          _const_spec(single_w, (n, n), lambda i: (0, 0))],
                out_specs=pl.BlockSpec((tm, n), lambda i: (i, 0)),
            ),
            compiler_params=pltpu.CompilerParams(
                dimension_semantics=("parallel",),
                vmem_limit_bytes=_vmem_limit(vmem_need),
            ),
            cost_estimate=cost,
        )

    return _run(build, x2d, w)


def _idct_small_packed(x2d, m, n, w_dtype, mm_dtype):
    """n < 128, 128 % n == 0, m % (128//n) == 0: pack r rows per vreg row
    and multiply by block-diagonal W -> lane-dense output, no transposes."""
    r = 128 // n
    mp = m // r
    xp = x2d.reshape(mp, r * n)                    # free row-major reshape
    wp = jnp.asarray(_idct_packed_matrix_np(n, r), dtype=w_dtype)
    isx = jnp.dtype(x2d.dtype).itemsize
    isw = jnp.dtype(w_dtype).itemsize

    tm = _split_rows(mp, 512)                      # ~ r*512 original rows/step
    grid = (pl.cdiv(mp, tm),)
    vmem_need = 2 * isw * 128 * 128 + 4 * isx * tm * 128
    cost = pl.CostEstimate(flops=2 * mp * 128 * 128, transcendentals=0,
                           bytes_accessed=isx * 2 * m * n + isw * 128 * 128)
    kern = functools.partial(_matmul_kernel, mm_dtype=mm_dtype)

    def build(single_w):
        return pl.pallas_call(
            kern,
            out_shape=jax.ShapeDtypeStruct((mp, r * n), x2d.dtype),
            grid_spec=pltpu.PrefetchScalarGridSpec(
                num_scalar_prefetch=0,
                grid=grid,
                in_specs=[pl.BlockSpec((tm, r * n), lambda i: (i, 0)),
                          _const_spec(single_w, (r * n, r * n), lambda i: (0, 0))],
                out_specs=pl.BlockSpec((tm, r * n), lambda i: (i, 0)),
            ),
            compiler_params=pltpu.CompilerParams(
                dimension_semantics=("parallel",),
                vmem_limit_bytes=_vmem_limit(vmem_need),
            ),
            cost_estimate=cost,
        )

    return _run(build, xp, wp)


def _idct_ntiled(x2d, w, m, n, mm_dtype, tm, tn, budget):
    """Full-K strips, W column-tiled (outer axis): W streamed from HBM once,
    x re-read n_tiles times."""
    isx = jnp.dtype(x2d.dtype).itemsize
    isw = jnp.dtype(w.dtype).itemsize
    tm = max(8, min(tm, _round_up(m, 8)))
    tn = max(128, (min(tn, _round_up(n, 128)) // 128) * 128)

    def footprint(tm_, tn_):
        return 2 * isx * tm_ * n + 2 * isw * n * tn_ + 2 * isx * tm_ * tn_

    while footprint(tm, tn) > budget and tn > 128:
        tn = max(128, ((tn // 2) // 128) * 128)
    while footprint(tm, tn) > budget and tm > 8:
        tm = max(8, ((tm // 2) // 8) * 8)

    n_tiles = pl.cdiv(n, tn)
    m_tiles = pl.cdiv(m, tm)
    grid = (n_tiles, m_tiles)                      # W tile outer, rows inner
    cost = pl.CostEstimate(
        flops=2 * m * n * n, transcendentals=0,
        bytes_accessed=isx * m * n * n_tiles + isw * n * n + isx * m * n)
    kern = functools.partial(_matmul_kernel, mm_dtype=mm_dtype)

    return pl.pallas_call(
        kern,
        out_shape=jax.ShapeDtypeStruct((m, n), x2d.dtype),
        grid_spec=pltpu.PrefetchScalarGridSpec(
            num_scalar_prefetch=0,
            grid=grid,
            in_specs=[pl.BlockSpec((tm, n), lambda j, i: (i, 0)),
                      pl.BlockSpec((n, tn), lambda j, i: (0, j))],
            out_specs=pl.BlockSpec((tm, tn), lambda j, i: (i, j)),
        ),
        compiler_params=pltpu.CompilerParams(
            dimension_semantics=("parallel", "parallel"),
            vmem_limit_bytes=_vmem_limit(footprint(tm, tn)),
        ),
        cost_estimate=cost,
    )(x2d, w)


def _idct_ktiled(x2d, w, m, n, mm_dtype, tm, tn, tk):
    """3D-tiled matmul with f32 accumulator scratch; reduction axis last.
    Requires n % 128 == 0 so a K tile that exactly divides n exists (no
    garbage is accumulated from ragged K blocks)."""
    isx = jnp.dtype(x2d.dtype).itemsize
    isw = jnp.dtype(w.dtype).itemsize
    for cand in (tk, 1024, 512, 256, 128):
        if 128 <= cand <= n and n % cand == 0:
            tk = cand
            break
    else:
        tk = 128
    tm = max(8, min(tm, _round_up(m, 8)))
    tn = max(128, (min(tn, n) // 128) * 128)

    m_tiles = pl.cdiv(m, tm)
    n_tiles = pl.cdiv(n, tn)
    k_tiles = n // tk
    grid = (m_tiles, n_tiles, k_tiles)             # reduction axis last
    vmem_need = (2 * isx * tm * tk + 2 * isw * tk * tn
                 + 2 * isx * tm * tn + 4 * tm * tn)
    cost = pl.CostEstimate(
        flops=2 * m * n * n, transcendentals=0,
        bytes_accessed=(isx * m * n * n_tiles + isw * n * n * m_tiles
                        + isx * m * n))
    kern = functools.partial(_matmul_acc_kernel, mm_dtype=mm_dtype)

    return pl.pallas_call(
        kern,
        out_shape=jax.ShapeDtypeStruct((m, n), x2d.dtype),
        grid_spec=pltpu.PrefetchScalarGridSpec(
            num_scalar_prefetch=0,
            grid=grid,
            in_specs=[pl.BlockSpec((tm, tk), lambda i, j, k: (i, k)),
                      pl.BlockSpec((tk, tn), lambda i, j, k: (k, j))],
            out_specs=pl.BlockSpec((tm, tn), lambda i, j, k: (i, j)),
            scratch_shapes=[pltpu.VMEM((tm, tn), jnp.float32)],
        ),
        compiler_params=pltpu.CompilerParams(
            dimension_semantics=("parallel", "parallel", "arbitrary"),
            vmem_limit_bytes=_vmem_limit(vmem_need),
        ),
        cost_estimate=cost,
    )(x2d, w)


# ---------------------------------------------------------------------------
# Top-level wrapper
# ---------------------------------------------------------------------------

def idct_pallas(x, wmat=None, *, matmul_dtype=None, tm=None, tn=None, tk=None,
                force_path=None):
    """IDCT (DCT-III) along the last axis of x using Pallas TPU kernels.

    matmul_dtype: optional reduced-precision matmul dtype (e.g. jnp.bfloat16);
                  coefficients stay float32 by default.
    force_path:   None | "resident" | "ntiled" | "ktiled" (testing / tuning,
                  large-N paths only).
    """
    orig_shape = x.shape
    n = orig_shape[-1]
    x2d = x.reshape(-1, n)
    m = x2d.shape[0]

    d_tm, d_tn, d_tk = _default_tiles()
    tm = d_tm if tm is None else tm
    tn = d_tn if tn is None else tn
    tk = d_tk if tk is None else tk
    w_dtype = jnp.dtype(matmul_dtype) if matmul_dtype is not None else jnp.dtype(jnp.float32)
    budget = _vmem_budget()
    isx = jnp.dtype(x.dtype).itemsize
    isw = jnp.dtype(w_dtype).itemsize

    if n < 128 and force_path is None:
        if 128 % n == 0 and m % (128 // n) == 0:
            out2d = _idct_small_packed(x2d, m, n, w_dtype, matmul_dtype)
        else:
            # TODO(synk): masked-store path (output lane dim < 128); only hit
            # when n does not divide 128 or m is not a multiple of 128//n.
            w = _get_w(wmat, n, w_dtype)
            out2d = _idct_resident(x2d, w, m, n, matmul_dtype, tm=2048)
    else:
        w = _get_w(wmat, n, w_dtype)
        path = force_path
        if path is None:
            if 2 * n * n * isw <= budget // 3:
                path = "resident"
            elif (2 * isx * tm * n + 2 * isw * n * min(tn, _round_up(n, 128))
                  + 2 * isx * tm * min(tn, _round_up(n, 128))) <= (budget * 3) // 4:
                path = "ntiled"
            elif n % 128 == 0:
                path = "ktiled"
            else:
                # TODO(synk): huge N not a multiple of 128 would need a masked
                # K-tiled reduction; fall back to N-tiling with shrunken strips.
                path = "ntiled"
        if path == "ktiled" and n % 128 != 0:
            path = "ntiled"

        if path == "resident":
            out2d = _idct_resident(x2d, w, m, n, matmul_dtype, tm=tm)
        elif path == "ntiled":
            out2d = _idct_ntiled(x2d, w, m, n, matmul_dtype, tm, tn, budget)
        else:
            out2d = _idct_ktiled(x2d, w, m, n, matmul_dtype, tm, tn, tk)

    return out2d.reshape(orig_shape)


class IDCT:
    """Mirror of the PyTorch IDCT module (forward only)."""

    def __init__(self, expk=None, algorithm="N", matmul_dtype=None):
        # `expk` kept for API parity; the transform matrix is rebuilt (and
        # cached per (N, dtype)) whenever the last-dim size changes, exactly
        # like the PyTorch module rebuilds expk.  'N' and '2N' produce
        # identical results for this forward pass.
        self.expk = expk
        self.algorithm = algorithm
        self.matmul_dtype = matmul_dtype
        self._wmat = None
        self._wkey = None

    def __call__(self, x):
        n = x.shape[-1]
        w_dtype = (jnp.dtype(self.matmul_dtype) if self.matmul_dtype is not None
                   else jnp.dtype(jnp.float32))
        key = (n, w_dtype)
        if self._wmat is None or self._wkey != key:
            self._wmat = _idct_matrix(n, dtype=w_dtype)
            self._wkey = key
        return idct_pallas(x, self._wmat, matmul_dtype=self.matmul_dtype)

    forward = __call__


# ---------------------------------------------------------------------------
# Reference + self-test
# ---------------------------------------------------------------------------

def _idct_reference(x):
    n = x.shape[-1]
    w = _idct_matrix_np(n).astype(np.float64)
    xr = np.asarray(x, dtype=np.float64).reshape(-1, n)
    return (xr @ w).reshape(x.shape)


if __name__ == "__main__":
    key = jax.random.PRNGKey(0)
    k1, k2, k3, k4 = jax.random.split(key, 4)

    # 1) small-N packed path (n=16 divides 128, no HBM transposes).
    x_small = jax.random.normal(k1, (2, 4, 16, 16), dtype=jnp.float32)
    module = IDCT(algorithm="N")
    y_small = jax.block_until_ready(module(x_small))
    assert y_small.shape == x_small.shape
    np.testing.assert_allclose(np.asarray(y_small, dtype=np.float64),
                               _idct_reference(x_small), rtol=1e-4, atol=1e-3)

    # 2) resident-W path, ragged row count, >= 2 parallel row tiles.
    x_big = jax.random.normal(k2, (1, 1, 200, 256), dtype=jnp.float32)
    y_big = jax.block_until_ready(IDCT(algorithm="2N")(x_big))
    assert y_big.shape == x_big.shape
    np.testing.assert_allclose(np.asarray(y_big, dtype=np.float64),
                               _idct_reference(x_big), rtol=1e-4, atol=1e-3)

    # 3) N-tiled and K-tiled large-N paths exercised at small size.
    x_mid = jax.random.normal(k3, (64, 256), dtype=jnp.float32)
    y_nt = jax.block_until_ready(
        idct_pallas(x_mid, force_path="ntiled", tm=32, tn=128))
    np.testing.assert_allclose(np.asarray(y_nt, dtype=np.float64),
                               _idct_reference(x_mid), rtol=1e-4, atol=1e-3)
    y_kt = jax.block_until_ready(
        idct_pallas(x_mid, force_path="ktiled", tm=32, tn=128, tk=128))
    np.testing.assert_allclose(np.asarray(y_kt, dtype=np.float64),
                               _idct_reference(x_mid), rtol=1e-4, atol=1e-3)

    # 4) small-N fallback (n does not divide 128).
    x_odd = jax.random.normal(k4, (5, 24, 24), dtype=jnp.float32)
    y_odd = jax.block_until_ready(idct_pallas(x_odd))
    np.testing.assert_allclose(np.asarray(y_odd, dtype=np.float64),
                               _idct_reference(x_odd), rtol=1e-4, atol=1e-3)

    print("KERNEL_OK")
</pallas_src>

<mosaic_0001>
module attributes {stable_mosaic.version = 11 : i64} {
  func.func @_matmul_kernel(%arg0: i32, %arg1: memref<8x128xf32, #tpu.memory_space<vmem>>, %arg2: memref<128x128xf32, #tpu.memory_space<vmem>>, %arg3: memref<8x128xf32, #tpu.memory_space<vmem>>) attributes {dimension_semantics = [#tpu.dimension_semantics<parallel>], iteration_bounds = array<i64: 2>, scalar_prefetch = 0 : i64, scratch_operands = 0 : i64, tpu.core_type = #tpu.core_type<tc>, window_params = [{transform_indices = @transform_0, window_bounds = array<i64: 8, 128>}, {pipeline_mode = #tpu.pipeline_mode<synchronous>, transform_indices = @transform_1, window_bounds = array<i64: 128, 128>}, {transform_indices = @transform_2, window_bounds = array<i64: 8, 128>}]} {
    %c0 = arith.constant 0 : index
    %c0_0 = arith.constant 0 : index
    %0 = vector.load %arg1[%c0, %c0_0] : memref<8x128xf32, #tpu.memory_space<vmem>>, vector<8x128xf32>
    %c0_1 = arith.constant 0 : index
    %c0_2 = arith.constant 0 : index
    %1 = vector.load %arg2[%c0_1, %c0_2] : memref<128x128xf32, #tpu.memory_space<vmem>>, vector<128x128xf32>
    %cst = arith.constant dense<0.000000e+00> : vector<8x128xf32>
    %2 = tpu.matmul %0, %1, %cst {dimension_numbers = #tpu.dot_dimension_numbers<[1], [0], [0], [1], [0, 0, 1, 1], [], []>} : vector<8x128xf32>, vector<128x128xf32>, vector<8x128xf32> -> vector<8x128xf32>
    %c0_3 = arith.constant 0 : index
    %c0_4 = arith.constant 0 : index
    %3 = vector.load %arg3[%c0_3, %c0_4] : memref<8x128xf32, #tpu.memory_space<vmem>>, vector<8x128xf32>
    tpu.vector_store %arg3[%c0_3, %c0_4], %2 {strides = array<i32>} : memref<8x128xf32, #tpu.memory_space<vmem>>, vector<8x128xf32>,
    return
  }
  func.func @transform_0(%arg0: i32) -> (i32, i32) {
    %c0_i32 = arith.constant 0 : i32
    %c0_i32_0 = arith.constant 0 : i32
    return %arg0, %c0_i32 : i32, i32
  }
  func.func @transform_1(%arg0: i32) -> (i32, i32) {
    %c0_i32 = arith.constant 0 : i32
    %c0_i32_0 = arith.constant 0 : i32
    %c0_i32_1 = arith.constant 0 : i32
    return %c0_i32, %c0_i32_0 : i32, i32
  }
  func.func @transform_2(%arg0: i32) -> (i32, i32) {
    %c0_i32 = arith.constant 0 : i32
    %c0_i32_0 = arith.constant 0 : i32
    return %arg0, %c0_i32 : i32, i32
  }
}

module attributes {stable_mosaic.version = 11 : i64} {
  func.func @_matmul_kernel(%arg0: i32, %arg1: memref<8x128xf32, #tpu.memory_space<vmem>>, %arg2: memref<128x128xf32, #tpu.memory_space<vmem>>, %arg3: memref<8x128xf32, #tpu.memory_space<vmem>>) attributes {dimension_semantics = [#tpu.dimension_semantics<parallel>], iteration_bounds = array<i64: 2>, scalar_prefetch = 0 : i64, scratch_operands = 0 : i64, tpu.core_type = #tpu.core_type<tc>, window_params = [{transform_indices = @transform_0, window_bounds = array<i64: 8, 128>}, {pipeline_mode = #tpu.pipeline_mode<synchronous>, transform_indices = @transform_1, window_bounds = array<i64: 128, 128>}, {transform_indices = @transform_2, window_bounds = array<i64: 8, 128>}]} {
    %c0 = arith.constant 0 : index
    %c0_0 = arith.constant 0 : index
    %0 = vector.load %arg1[%c0, %c0_0] : memref<8x128xf32, #tpu.memory_space<vmem>>, vector<8x128xf32>
    %c0_1 = arith.constant 0 : index
    %c0_2 = arith.constant 0 : index
    %1 = vector.load %arg2[%c0_1, %c0_2] : memref<128x128xf32, #tpu.memory_space<vmem>>, vector<128x128xf32>
    %cst = arith.constant dense<0.000000e+00> : vector<8x128xf32>
    %2 = tpu.matmul %0, %1, %cst {dimension_numbers = #tpu.dot_dimension_numbers<[1], [0], [0], [1], [0, 0, 1, 1], [], []>} : vector<8x128xf32>, vector<128x128xf32>, vector<8x128xf32> -> vector<8x128xf32>
    %c0_3 = arith.constant 0 : index
    %c0_4 = arith.constant 0 : index
    %3 = vector.load %arg3[%c0_3, %c0_4] : memref<8x128xf32, #tpu.memory_space<vmem>>, vector<8x128xf32>
    tpu.vector_store %arg3[%c0_3, %c0_4], %2 {strides = array<i32>} : memref<8x128xf32, #tpu.memory_space<vmem>>, vector<8x128xf32>,
    return
  }
  func.func @transform_0(%arg0: i32) -> (i32, i32) {
    %c0_i32 = arith.constant 0 : i32
    %c0_i32_0 = arith.constant 0 : i32
    return %arg0, %c0_i32 : i32, i32
  }
  func.func @transform_1(%arg0: i32) -> (i32, i32) {
    %c0_i32 = arith.constant 0 : i32
    %c0_i32_0 = arith.constant 0 : i32
    %c0_i32_1 = arith.constant 0 : i32
    return %c0_i32, %c0_i32_0 : i32, i32
  }
  func.func @transform_2(%arg0: i32) -> (i32, i32) {
    %c0_i32 = arith.constant 0 : i32
    %c0_i32_0 = arith.constant 0 : i32
    return %arg0, %c0_i32 : i32, i32
  }
}

</mosaic_0001>

<llo_original>
// kernel: tpu_custom_call.1
$region0: #{tpu_custom_call.1}
  #allocation0 [shape = 'u32[]', space=smem, size = 0x4, offset = 0x4, fixed_abs, tag = 'smem constant byte address 0x4 - core index']
  #allocation1 [shape = 'u32[144,128]{1,0:T(1,128)}', space=vmem, size = 0x12000, scoped, tag = 'internal scratch']
  %s0 = inlined_call_operand.hbm [shape: f32[16,128], index: 0, kind: input, shape index: {}]
  %s1 = inlined_call_operand.hbm [shape: f32[128,128], index: 1, kind: input, shape index: {}]
  %s2 = inlined_call_operand.hbm [shape: f32[16,128], index: 2, kind: output, shape index: {}]
  %s3 = sld [smem:[#allocation0]]
  $region49: #{tpu_custom_call.1} parent=0
    _
  %s5 = ssub.s32 1, %s3
  %s6 = scalar_select 0, %s5, %s3
  $region1: #{tpu_custom_call.1} parent=0
    #allocation2 [shape = 'u8[8192]{0}', space=vmem, size = 0x2000, scoped, tag = 'input window, operand 0']
    #allocation3 [shape = 's32[2]{0}', space=sflag, size = 0x8, scoped, tag = 'scoped memory for tpu_custom_call.1']
    #allocation4 [shape = 's32[2]{0}', space=sflag, size = 0x8, scoped, tag = 'scoped memory for tpu_custom_call.1']
    #allocation5 [shape = 'u8[65536]{0}', space=vmem, size = 0x10000, scoped, tag = 'input window, operand 1, single buffered']
    #allocation6 [shape = 's32[1]{0}', space=sflag, size = 0x4, scoped, tag = 'scoped memory for tpu_custom_call.1']
    #allocation7 [shape = 'u8[8192]{0}', space=vmem, size = 0x2000, scoped, tag = 'output window, operand 0']
    %7 = vsyncpa [#allocation3], 0
    %s8 = scalar_lea.sflag [#allocation3], 1
    %9 = vsyncpa %s8, 0
    %10 = vsyncpa [#allocation6], 0
    %11 = vsyncpa [#allocation4], 0
    %s12 = scalar_lea.sflag [#allocation4], 1
    %13 = vsyncpa %s12, 0
    loop: start=0, step=1, limit=4
    $region2: #{tpu_custom_call.1} parent=1 // loop_pre_header
      _
    $region3: #{tpu_custom_call.1} parent=1 // loop_header
      %s15 = sphi 0, %s19
      %p16 = scmp.ge.s32.totalorder %s15, 4
      %s25 = sphi 0, %s27
      %s28 = sphi 0, %s25
      %s29 = sphi 0, %s28
      %s45 = sphi 0, %s29
      %s49 = sphi 0, %s49
      %s51 = sphi 0, %s49
      %s52 = sphi 0, %s51
      %s66 = sphi 0, %s52
      %s72 = sphi 0, %s74
      %s75 = sphi 0, %s72
      %s76 = sphi 0, %s75
      %s92 = sphi 0, %s76
    $region4: #{tpu_custom_call.1} parent=1 // loop_header_branch
      %18 = sbr.rel (%p16) target = $region8
    $region5: #{tpu_custom_call.1} parent=1 // loop_body
      %s20 = ssub.s32 %s15, 1
      %s21 = ssub.s32 %s15, 2
      %s22 = sadd.s32 %s15, 1
      %s23 = ssub.s32 %s15, %s22
      %p24 = scmp.eq.s32.totalorder %s23, 0
      %s26 = sadd.s32 %s25, 1
      %s27 = scalar_select %p24, %s25, %s26
      %p30 = pneg %p24
      %p31 = scmp.eq.s32.totalorder %s15, 1
      %p32 = por %p30, %p31
      %p33 = scmp.ne.s32.totalorder %s25, %s28
      %p34 = scmp.eq.s32.totalorder %s15, 0
      %p35 = por %p33, %p34
      %p36 = scmp.ne.s32.totalorder %s25, %s28
      %p37 = scmp.eq.s32.totalorder %s20, 1
      %p38 = por %p36, %p37
      %p39 = scmp.ne.s32.totalorder %s28, %s29
      %p40 = scmp.eq.s32.totalorder %s20, 0
      %p41 = por %p39, %p40
      %p42 = scmp.ne.s32.totalorder %s28, %s29
      %p43 = scmp.eq.s32.totalorder %s21, 1
      %p44 = por %p42, %p43
      %p46 = scmp.ne.s32.totalorder %s29, %s45
      %p47 = scmp.eq.s32.totalorder %s21, 0
      %p48 = por %p46, %p47
      %s50 = sadd.s32 %s49, 1
      %p53 = scmp.eq.s32.totalorder %s15, 1
      %p54 = scmp.ne.s32.totalorder %s49, %s51
      %p55 = scmp.eq.s32.totalorder %s15, 0
      %p56 = por %p54, %p55
      %p57 = scmp.ne.s32.totalorder %s49, %s51
      %p58 = scmp.eq.s32.totalorder %s20, 1
      %p59 = por %p57, %p58
      %p60 = scmp.ne.s32.totalorder %s51, %s52
      %p61 = scmp.eq.s32.totalorder %s20, 0
      %p62 = por %p60, %p61
      %p63 = scmp.ne.s32.totalorder %s51, %s52
      %p64 = scmp.eq.s32.totalorder %s21, 1
      %p65 = por %p63, %p64
      %p67 = scmp.ne.s32.totalorder %s52, %s66
      %p68 = scmp.eq.s32.totalorder %s21, 0
      %p69 = por %p67, %p68
      %s70 = ssub.s32 %s15, %s22
      %p71 = scmp.eq.s32.totalorder %s70, 0
      %s73 = sadd.s32 %s72, 1
      %s74 = scalar_select %p71, %s72, %s73
      %p77 = pneg %p71
      %p78 = scmp.eq.s32.totalorder %s15, 1
      %p79 = por %p77, %p78
      %p80 = scmp.ne.s32.totalorder %s72, %s75
      %p81 = scmp.eq.s32.totalorder %s15, 0
      %p82 = por %p80, %p81
      %p83 = scmp.ne.s32.totalorder %s72, %s75
      %p84 = scmp.eq.s32.totalorder %s20, 1
      %p85 = por %p83, %p84
      %p86 = scmp.ne.s32.totalorder %s75, %s76
      %p87 = scmp.eq.s32.totalorder %s20, 0
      %p88 = por %p86, %p87
      %p89 = scmp.ne.s32.totalorder %s75, %s76
      %p90 = scmp.eq.s32.totalorder %s21, 1
      %p91 = por %p89, %p90
      %p93 = scmp.ne.s32.totalorder %s76, %s92
      %p94 = scmp.eq.s32.totalorder %s21, 0
      %p95 = por %p93, %p94
      %p96 = scmp.le.s32.totalorder 1, %s15
      %p97 = scmp.lt.s32.totalorder %s15, 3
      %p98 = pnand %p96, %p97
      %p99 = pneg %p98
      // Predicated region
      $region9: #{tpu_custom_call.1} parent=5 // pred_check
        _
      $region10: #{tpu_custom_call.1} parent=5 // pred_check_branch
        %101 = sbr.rel (%p98) target = $region12
      $region11: #{tpu_custom_call.1} parent=5 // pred_region
        %s102 = ssub.s32 %s15, 1
        // Predicated region
        $region13: #{tpu_custom_call.1} parent=11 // pred_check
          %p103 = pneg %p62
        $region14: #{tpu_custom_call.1} parent=11 // pred_check_branch
          %105 = sbr.rel (%p103) target = $region16
        $region15: #{tpu_custom_call.1} parent=11 // pred_region
          %s107 = ssub.s32 2048, 2048
          %108 = vsyncadd [#allocation6], %s107
          %s109 = sshll.u32 [#allocation5], 4
          %s110 = int_to_ptr.vmem [resolvable:$true] %s109
          %115 = dma.hbm_to_vmem [thread:$0]  %s1, 2048, %s110, [#allocation6], 128, 128, 8
        $region16: #{tpu_custom_call.1} parent=11 // pred_fallthru
          _
      $region12: #{tpu_custom_call.1} parent=5 // pred_fallthru
        _
      %p116 = scmp.lt.s32.totalorder %s15, 2
      // Predicated region
      $region17: #{tpu_custom_call.1} parent=5 // pred_check
        %p117 = pneg %p116
      $region18: #{tpu_custom_call.1} parent=5 // pred_check_branch
        %119 = sbr.rel (%p117) target = $region20
      $region19: #{tpu_custom_call.1} parent=5 // pred_region
        // Predicated region
        $region21: #{tpu_custom_call.1} parent=19 // pred_check
          %p120 = pneg %p35
        $region22: #{tpu_custom_call.1} parent=19 // pred_check_branch
          %122 = sbr.rel (%p120) target = $region24
        $region23: #{tpu_custom_call.1} parent=19 // pred_region
          %s123 = sand.u32 %s25, 1
          %s124 = scalar_lea.sflag [#allocation3], %s123
          %s125 = sand.u32 %s25, 1
          %s126 = smul.addr %s125, 8
          %s127 = scalar_lea.vmem [#allocation2], %s126
          %s129 = ssub.s32 128, 128
          %130 = vsyncadd %s124, %s129
          %s131 = smul.addr %s15, 128
          %s132 = scalar_lea.hbm %s0, %s131
          %s134 = sshll.u32 %s127, 4
          %s135 = int_to_ptr.vmem [resolvable:$true] %s134
          %137 = dma.hbm_to_vmem [thread:$0]  %s132, 128, %s135, %s124
        $region24: #{tpu_custom_call.1} parent=19 // pred_fallthru
          _
      $region20: #{tpu_custom_call.1} parent=5 // pred_fallthru
        _
      %p138 = scmp.le.s32.totalorder 1, %s15
      %p139 = scmp.lt.s32.totalorder %s15, 3
      %p140 = pnand %p138, %p139
      %p141 = pneg %p140
      // Predicated region
      $region25: #{tpu_custom_call.1} parent=5 // pred_check
        _
      $region26: #{tpu_custom_call.1} parent=5 // pred_check_branch
        %143 = sbr.rel (%p140) target = $region28
      $region27: #{tpu_custom_call.1} parent=5 // pred_region
        %s144 = ssub.s32 %s15, 1
        %s145 = sand.u32 %s28, 1
        %s146 = scalar_lea.sflag [#allocation3], %s145
        %s147 = sand.u32 %s28, 1
        %s148 = smul.addr %s147, 8
        %s149 = scalar_lea.vmem [#allocation2], %s148
        // Predicated region
        $region29: #{tpu_custom_call.1} parent=27 // pred_check
          %p150 = pneg %p41
        $region30: #{tpu_custom_call.1} parent=27 // pred_check_branch
          %152 = sbr.rel (%p150) target = $region32
        $region31: #{tpu_custom_call.1} parent=27 // pred_region
          %153 = dma.done %s146, 128
        $region32: #{tpu_custom_call.1} parent=27 // pred_fallthru
          _
        // Predicated region
        $region33: #{tpu_custom_call.1} parent=27 // pred_check
          %p154 = pneg %p62
        $region34: #{tpu_custom_call.1} parent=27 // pred_check_branch
          %156 = sbr.rel (%p154) target = $region36
        $region35: #{tpu_custom_call.1} parent=27 // pred_region
          %157 = dma.done [#allocation6], 2048
        $region36: #{tpu_custom_call.1} parent=27 // pred_fallthru
          _
        %s158 = sand.u32 %s28, 1
        %s159 = scalar_lea.sflag [#allocation3], %s158
        %s160 = sand.u32 %s28, 1
        %s161 = smul.addr %s160, 8
        %s162 = scalar_lea.vmem [#allocation2], %s161
        %p163 = pneg %p41
        %p164 = pneg %p38
        %p165 = pneg %p62
        %p166 = pneg %p59
        %p167 = pneg %p88
        %p168 = pneg %p85
        %s169 = sand.u32 %s75, 1
        %s170 = scalar_lea.sflag [#allocation4], %s169
        %s171 = sand.u32 %s75, 1
        %s172 = smul.addr %s171, 8
        %s173 = scalar_lea.vmem [#allocation7], %s172
        %v174 = vld [vmem:[%s149] sm:$0xff]
        %v175 = vld [vmem:[#allocation5] sm:$0xff]
        %v176 = vld [vmem:[#allocation5 + $0x8] sm:$0xff]
        %v177 = vld [vmem:[#allocation5 + $0x10] sm:$0xff]
        %v178 = vld [vmem:[#allocation5 + $0x18] sm:$0xff]
        %v179 = vld [vmem:[#allocation5 + $0x20] sm:$0xff]
        %v180 = vld [vmem:[#allocation5 + $0x28] sm:$0xff]
        %v181 = vld [vmem:[#allocation5 + $0x30] sm:$0xff]
        %v182 = vld [vmem:[#allocation5 + $0x38] sm:$0xff]
        %v183 = vld [vmem:[#allocation5 + $0x40] sm:$0xff]
        %v184 = vld [vmem:[#allocation5 + $0x48] sm:$0xff]
        %v185 = vld [vmem:[#allocation5 + $0x50] sm:$0xff]
        %v186 = vld [vmem:[#allocation5 + $0x58] sm:$0xff]
        %v187 = vld [vmem:[#allocation5 + $0x60] sm:$0xff]
        %v188 = vld [vmem:[#allocation5 + $0x68] sm:$0xff]
        %v189 = vld [vmem:[#allocation5 + $0x70] sm:$0xff]
        %v190 = vld [vmem:[#allocation5 + $0x78] sm:$0xff]
        %191 = vmatprep.subr.mxu0 0.0
        %192 = vmatpush1.msra.mxu0 %v175
        %193 = vmatprep.subr.mxu0 0.0
        %194 = vmatpush1.msra.mxu0 %v176
        %195 = vmatprep.subr.mxu0 0.0
        %196 = vmatpush1.msra.mxu0 %v177
        %197 = vmatprep.subr.mxu0 0.0
        %198 = vmatpush1.msra.mxu0 %v178
        %199 = vmatprep.subr.mxu0 0.0
        %200 = vmatpush1.msra.mxu0 %v179
        %201 = vmatprep.subr.mxu0 0.0
        %202 = vmatpush1.msra.mxu0 %v180
        %203 = vmatprep.subr.mxu0 0.0
        %204 = vmatpush1.msra.mxu0 %v181
        %205 = vmatprep.subr.mxu0 0.0
        %206 = vmatpush1.msra.mxu0 %v182
        %207 = vmatprep.subr.mxu0 0.0
        %208 = vmatpush1.msra.mxu0 %v183
        %209 = vmatprep.subr.mxu0 0.0
        %210 = vmatpush1.msra.mxu0 %v184
        %211 = vmatprep.subr.mxu0 0.0
        %212 = vmatpush1.msra.mxu0 %v185
        %213 = vmatprep.subr.mxu0 0.0
        %214 = vmatpush1.msra.mxu0 %v186
        %215 = vmatprep.subr.mxu0 0.0
        %216 = vmatpush1.msra.mxu0 %v187
        %217 = vmatprep.subr.mxu0 0.0
        %218 = vmatpush1.msra.mxu0 %v188
        %219 = vmatprep.subr.mxu0 0.0
        %220 = vmatpush1.msra.mxu0 %v189
        %221 = vmatprep.subr.mxu0 0.0
        %222 = vmatpush1.msra.mxu0 %v190
        %223 = vmatprep.subr.mxu0 0.0
        %224 = vmatpush1.msra.mxu0 0.0
        %225 = vmatprep.subr.mxu0 0.0
        %226 = vmatpush1.msra.mxu0 0.0
        %227 = vmatprep.subr.mxu0 0.0
        %228 = vmatpush1.msra.mxu0 0.0
        %229 = vmatprep.subr.mxu0 0.0
        %230 = vmatpush1.msra.mxu0 0.0
        %231 = vmatprep.subr.mxu0 0.0
        %232 = vmatpush1.msra.mxu0 0.0
        %233 = vmatprep.subr.mxu0 0.0
        %234 = vmatpush1.msra.mxu0 0.0
        %235 = vmatprep.subr.mxu0 0.0
        %236 = vmatpush1.msra.mxu0 0.0
        %237 = vmatprep.subr.mxu0 0.0
        %238 = vmatpush1.msra.mxu0 0.0
        %239 = vmatprep.subr.mxu0 0.0
        %240 = vmatpush1.msra.mxu0 0.0
        %241 = vmatprep.subr.mxu0 0.0
        %242 = vmatpush1.msra.mxu0 0.0
        %243 = vmatprep.subr.mxu0 0.0
        %244 = vmatpush1.msra.mxu0 0.0
        %245 = vmatprep.subr.mxu0 0.0
        %246 = vmatpush1.msra.mxu0 0.0
        %247 = vmatprep.subr.mxu0 0.0
        %248 = vmatpush1.msra.mxu0 0.0
        %249 = vmatprep.subr.mxu0 0.0
        %250 = vmatpush1.msra.mxu0 0.0
        %251 = vmatprep.subr.mxu0 0.0
        %252 = vmatpush1.msra.mxu0 0.0
        %253 = vmatprep.subr.mxu0 0.0
        %254 = vmatpush1.msra.mxu0 0.0
        %255 = vmatprep.mubr.f32.mxu0 0.0
        %256 = vmatmul.mubr.f32.gmra.mrb[0].mxu0 %v174
        %v257 = vpop.f32.mrb[0].mxu0
        %v258 = vadd.f32 0.0, %v257
        %v259 = vpop.f32.mrb[0].mxu0
        %260 = vdwg.mxu0
        %261 = vst [vmem:[%s173] sm:$0xff] %v258
        %s262 = sand.u32 %s75, 1
        %s263 = scalar_lea.sflag [#allocation4], %s262
        %s264 = sand.u32 %s75, 1
        %s265 = smul.addr %s264, 8
        %s266 = scalar_lea.vmem [#allocation7], %s265
        // Predicated region
        $region37: #{tpu_custom_call.1} parent=27 // pred_check
          %p267 = pneg %p85
        $region38: #{tpu_custom_call.1} parent=27 // pred_check_branch
          %269 = sbr.rel (%p267) target = $region40
        $region39: #{tpu_custom_call.1} parent=27 // pred_region
          %s271 = ssub.s32 128, 128
          %272 = vsyncadd %s263, %s271
          %s273 = smul.addr %s20, 128
          %s274 = scalar_lea.hbm %s2, %s273
          %s276 = sshll.u32 %s266, 4
          %s277 = int_to_ptr.vmem [resolvable:$true] %s276
          %279 = dma.vmem_to_hbm [thread:$0]  %s277, 128, %s274, %s263
        $region40: #{tpu_custom_call.1} parent=27 // pred_fallthru
          _
      $region28: #{tpu_custom_call.1} parent=5 // pred_fallthru
        _
      %p280 = scmp.le.s32.totalorder 2, %s15
      // Predicated region
      $region41: #{tpu_custom_call.1} parent=5 // pred_check
        %p281 = pneg %p280
      $region42: #{tpu_custom_call.1} parent=5 // pred_check_branch
        %283 = sbr.rel (%p281) target = $region44
      $region43: #{tpu_custom_call.1} parent=5 // pred_region
        %s284 = ssub.s32 %s15, 2
        // Predicated region
        $region45: #{tpu_custom_call.1} parent=43 // pred_check
          %p285 = pneg %p91
        $region46: #{tpu_custom_call.1} parent=43 // pred_check_branch
          %287 = sbr.rel (%p285) target = $region48
        $region47: #{tpu_custom_call.1} parent=43 // pred_region
          %s288 = sand.u32 %s76, 1
          %s289 = scalar_lea.sflag [#allocation4], %s288
          %s290 = sand.u32 %s76, 1
          %s291 = smul.addr %s290, 8
          %s292 = scalar_lea.vmem [#allocation7], %s291
          %293 = dma.done %s289, 128
        $region48: #{tpu_custom_call.1} parent=43 // pred_fallthru
          _
      $region44: #{tpu_custom_call.1} parent=5 // pred_fallthru
        _
    $region6: #{tpu_custom_call.1} parent=1 // loop_footer
      %s19 = sadd.s32 1, %s15
    $region7: #{tpu_custom_call.1} parent=1 // loop_footer_branch
      %14 = sbr.rel target = $region3
    $region8: #{tpu_custom_call.1} parent=1 // loop_exit
      _
    %294 = vsyncpa [#allocation3], 1
    %s295 = scalar_lea.sflag [#allocation3], 1
    %296 = vsyncpa %s295, 1
    %297 = vsyncpa [#allocation6], 1
    %298 = vsyncpa [#allocation4], 1
    %s299 = scalar_lea.sflag [#allocation4], 1
    %300 = vsyncpa %s299, 1

// kernel: tpu_custom_call.1
$region0: #{tpu_custom_call.1}
  #allocation0 [shape = 'u32[]', space=smem, size = 0x4, offset = 0x4, fixed_abs, tag = 'smem constant byte address 0x4 - core index']
  #allocation1 [shape = 'u32[144,128]{1,0:T(1,128)}', space=vmem, size = 0x12000, scoped, tag = 'internal scratch']
  %s0 = inlined_call_operand.hbm [shape: f32[16,128], index: 0, kind: input, shape index: {}]
  %s1 = inlined_call_operand.hbm [shape: f32[128,128], index: 1, kind: input, shape index: {}]
  %s2 = inlined_call_operand.hbm [shape: f32[16,128], index: 2, kind: output, shape index: {}]
  %s3 = sld [smem:[#allocation0]]
  $region49: #{tpu_custom_call.1} parent=0
    _
  %s5 = ssub.s32 1, %s3
  %s6 = scalar_select 0, %s5, %s3
  $region1: #{tpu_custom_call.1} parent=0
    #allocation2 [shape = 'u8[8192]{0}', space=vmem, size = 0x2000, scoped, tag = 'input window, operand 0']
    #allocation3 [shape = 's32[2]{0}', space=sflag, size = 0x8, scoped, tag = 'scoped memory for tpu_custom_call.1']
    #allocation4 [shape = 's32[2]{0}', space=sflag, size = 0x8, scoped, tag = 'scoped memory for tpu_custom_call.1']
    #allocation5 [shape = 'u8[65536]{0}', space=vmem, size = 0x10000, scoped, tag = 'input window, operand 1, single buffered']
    #allocation6 [shape = 's32[1]{0}', space=sflag, size = 0x4, scoped, tag = 'scoped memory for tpu_custom_call.1']
    #allocation7 [shape = 'u8[8192]{0}', space=vmem, size = 0x2000, scoped, tag = 'output window, operand 0']
    %7 = vsyncpa [#allocation3], 0
    %s8 = scalar_lea.sflag [#allocation3], 1
    %9 = vsyncpa %s8, 0
    %10 = vsyncpa [#allocation6], 0
    %11 = vsyncpa [#allocation4], 0
    %s12 = scalar_lea.sflag [#allocation4], 1
    %13 = vsyncpa %s12, 0
    loop: start=0, step=1, limit=4
    $region2: #{tpu_custom_call.1} parent=1 // loop_pre_header
      _
    $region3: #{tpu_custom_call.1} parent=1 // loop_header
      %s15 = sphi 0, %s19
      %p16 = scmp.ge.s32.totalorder %s15, 4
      %s25 = sphi 0, %s27
      %s28 = sphi 0, %s25
      %s29 = sphi 0, %s28
      %s45 = sphi 0, %s29
      %s49 = sphi 0, %s49
      %s51 = sphi 0, %s49
      %s52 = sphi 0, %s51
      %s66 = sphi 0, %s52
      %s72 = sphi 0, %s74
      %s75 = sphi 0, %s72
      %s76 = sphi 0, %s75
      %s92 = sphi 0, %s76
    $region4: #{tpu_custom_call.1} parent=1 // loop_header_branch
      %18 = sbr.rel (%p16) target = $region8
    $region5: #{tpu_custom_call.1} parent=1 // loop_body
      %s20 = ssub.s32 %s15, 1
      %s21 = ssub.s32 %s15, 2
      %s22 = sadd.s32 %s15, 1
      %s23 = ssub.s32 %s15, %s22
      %p24 = scmp.eq.s32.totalorder %s23, 0
      %s26 = sadd.s32 %s25, 1
      %s27 = scalar_select %p24, %s25, %s26
      %p30 = pneg %p24
      %p31 = scmp.eq.s32.totalorder %s15, 1
      %p32 = por %p30, %p31
      %p33 = scmp.ne.s32.totalorder %s25, %s28
      %p34 = scmp.eq.s32.totalorder %s15, 0
      %p35 = por %p33, %p34
      %p36 = scmp.ne.s32.totalorder %s25, %s28
      %p37 = scmp.eq.s32.totalorder %s20, 1
      %p38 = por %p36, %p37
      %p39 = scmp.ne.s32.totalorder %s28, %s29
      %p40 = scmp.eq.s32.totalorder %s20, 0
      %p41 = por %p39, %p40
      %p42 = scmp.ne.s32.totalorder %s28, %s29
      %p43 = scmp.eq.s32.totalorder %s21, 1
      %p44 = por %p42, %p43
      %p46 = scmp.ne.s32.totalorder %s29, %s45
      %p47 = scmp.eq.s32.totalorder %s21, 0
      %p48 = por %p46, %p47
      %s50 = sadd.s32 %s49, 1
      %p53 = scmp.eq.s32.totalorder %s15, 1
      %p54 = scmp.ne.s32.totalorder %s49, %s51
      %p55 = scmp.eq.s32.totalorder %s15, 0
      %p56 = por %p54, %p55
      %p57 = scmp.ne.s32.totalorder %s49, %s51
      %p58 = scmp.eq.s32.totalorder %s20, 1
      %p59 = por %p57, %p58
      %p60 = scmp.ne.s32.totalorder %s51, %s52
      %p61 = scmp.eq.s32.totalorder %s20, 0
      %p62 = por %p60, %p61
      %p63 = scmp.ne.s32.totalorder %s51, %s52
      %p64 = scmp.eq.s32.totalorder %s21, 1
      %p65 = por %p63, %p64
      %p67 = scmp.ne.s32.totalorder %s52, %s66
      %p68 = scmp.eq.s32.totalorder %s21, 0
      %p69 = por %p67, %p68
      %s70 = ssub.s32 %s15, %s22
      %p71 = scmp.eq.s32.totalorder %s70, 0
      %s73 = sadd.s32 %s72, 1
      %s74 = scalar_select %p71, %s72, %s73
      %p77 = pneg %p71
      %p78 = scmp.eq.s32.totalorder %s15, 1
      %p79 = por %p77, %p78
      %p80 = scmp.ne.s32.totalorder %s72, %s75
      %p81 = scmp.eq.s32.totalorder %s15, 0
      %p82 = por %p80, %p81
      %p83 = scmp.ne.s32.totalorder %s72, %s75
      %p84 = scmp.eq.s32.totalorder %s20, 1
      %p85 = por %p83, %p84
      %p86 = scmp.ne.s32.totalorder %s75, %s76
      %p87 = scmp.eq.s32.totalorder %s20, 0
      %p88 = por %p86, %p87
      %p89 = scmp.ne.s32.totalorder %s75, %s76
      %p90 = scmp.eq.s32.totalorder %s21, 1
      %p91 = por %p89, %p90
      %p93 = scmp.ne.s32.totalorder %s76, %s92
      %p94 = scmp.eq.s32.totalorder %s21, 0
      %p95 = por %p93, %p94
      %p96 = scmp.le.s32.totalorder 1, %s15
      %p97 = scmp.lt.s32.totalorder %s15, 3
      %p98 = pnand %p96, %p97
      %p99 = pneg %p98
      // Predicated region
      $region9: #{tpu_custom_call.1} parent=5 // pred_check
        _
      $region10: #{tpu_custom_call.1} parent=5 // pred_check_branch
        %101 = sbr.rel (%p98) target = $region12
      $region11: #{tpu_custom_call.1} parent=5 // pred_region
        %s102 = ssub.s32 %s15, 1
        // Predicated region
        $region13: #{tpu_custom_call.1} parent=11 // pred_check
          %p103 = pneg %p62
        $region14: #{tpu_custom_call.1} parent=11 // pred_check_branch
          %105 = sbr.rel (%p103) target = $region16
        $region15: #{tpu_custom_call.1} parent=11 // pred_region
          %s107 = ssub.s32 2048, 2048
          %108 = vsyncadd [#allocation6], %s107
          %s109 = sshll.u32 [#allocation5], 4
          %s110 = int_to_ptr.vmem [resolvable:$true] %s109
          %115 = dma.hbm_to_vmem [thread:$0]  %s1, 2048, %s110, [#allocation6], 128, 128, 8
        $region16: #{tpu_custom_call.1} parent=11 // pred_fallthru
          _
      $region12: #{tpu_custom_call.1} parent=5 // pred_fallthru
        _
      %p116 = scmp.lt.s32.totalorder %s15, 2
      // Predicated region
      $region17: #{tpu_custom_call.1} parent=5 // pred_check
        %p117 = pneg %p116
      $region18: #{tpu_custom_call.1} parent=5 // pred_check_branch
        %119 = sbr.rel (%p117) target = $region20
      $region19: #{tpu_custom_call.1} parent=5 // pred_region
        // Predicated region
        $region21: #{tpu_custom_call.1} parent=19 // pred_check
          %p120 = pneg %p35
        $region22: #{tpu_custom_call.1} parent=19 // pred_check_branch
          %122 = sbr.rel (%p120) target = $region24
        $region23: #{tpu_custom_call.1} parent=19 // pred_region
          %s123 = sand.u32 %s25, 1
          %s124 = scalar_lea.sflag [#allocation3], %s123
          %s125 = sand.u32 %s25, 1
          %s126 = smul.addr %s125, 8
          %s127 = scalar_lea.vmem [#allocation2], %s126
          %s129 = ssub.s32 128, 128
          %130 = vsyncadd %s124, %s129
          %s131 = smul.addr %s15, 128
          %s132 = scalar_lea.hbm %s0, %s131
          %s134 = sshll.u32 %s127, 4
          %s135 = int_to_ptr.vmem [resolvable:$true] %s134
          %137 = dma.hbm_to_vmem [thread:$0]  %s132, 128, %s135, %s124
        $region24: #{tpu_custom_call.1} parent=19 // pred_fallthru
          _
      $region20: #{tpu_custom_call.1} parent=5 // pred_fallthru
        _
      %p138 = scmp.le.s32.totalorder 1, %s15
      %p139 = scmp.lt.s32.totalorder %s15, 3
      %p140 = pnand %p138, %p139
      %p141 = pneg %p140
      // Predicated region
      $region25: #{tpu_custom_call.1} parent=5 // pred_check
        _
      $region26: #{tpu_custom_call.1} parent=5 // pred_check_branch
        %143 = sbr.rel (%p140) target = $region28
      $region27: #{tpu_custom_call.1} parent=5 // pred_region
        %s144 = ssub.s32 %s15, 1
        %s145 = sand.u32 %s28, 1
        %s146 = scalar_lea.sflag [#allocation3], %s145
        %s147 = sand.u32 %s28, 1
        %s148 = smul.addr %s147, 8
        %s149 = scalar_lea.vmem [#allocation2], %s148
        // Predicated region
        $region29: #{tpu_custom_call.1} parent=27 // pred_check
          %p150 = pneg %p41
        $region30: #{tpu_custom_call.1} parent=27 // pred_check_branch
          %152 = sbr.rel (%p150) target = $region32
        $region31: #{tpu_custom_call.1} parent=27 // pred_region
          %153 = dma.done %s146, 128
        $region32: #{tpu_custom_call.1} parent=27 // pred_fallthru
          _
        // Predicated region
        $region33: #{tpu_custom_call.1} parent=27 // pred_check
          %p154 = pneg %p62
        $region34: #{tpu_custom_call.1} parent=27 // pred_check_branch
          %156 = sbr.rel (%p154) target = $region36
        $region35: #{tpu_custom_call.1} parent=27 // pred_region
          %157 = dma.done [#allocation6], 2048
        $region36: #{tpu_custom_call.1} parent=27 // pred_fallthru
          _
        %s158 = sand.u32 %s28, 1
        %s159 = scalar_lea.sflag [#allocation3], %s158
        %s160 = sand.u32 %s28, 1
        %s161 = smul.addr %s160, 8
        %s162 = scalar_lea.vmem [#allocation2], %s161
        %p163 = pneg %p41
        %p164 = pneg %p38
        %p165 = pneg %p62
        %p166 = pneg %p59
        %p167 = pneg %p88
        %p168 = pneg %p85
        %s169 = sand.u32 %s75, 1
        %s170 = scalar_lea.sflag [#allocation4], %s169
        %s171 = sand.u32 %s75, 1
        %s172 = smul.addr %s171, 8
        %s173 = scalar_lea.vmem [#allocation7], %s172
        %v174 = vld [vmem:[%s149] sm:$0xff]
        %v175 = vld [vmem:[#allocation5] sm:$0xff]
        %v176 = vld [vmem:[#allocation5 + $0x8] sm:$0xff]
        %v177 = vld [vmem:[#allocation5 + $0x10] sm:$0xff]
        %v178 = vld [vmem:[#allocation5 + $0x18] sm:$0xff]
        %v179 = vld [vmem:[#allocation5 + $0x20] sm:$0xff]
        %v180 = vld [vmem:[#allocation5 + $0x28] sm:$0xff]
        %v181 = vld [vmem:[#allocation5 + $0x30] sm:$0xff]
        %v182 = vld [vmem:[#allocation5 + $0x38] sm:$0xff]
        %v183 = vld [vmem:[#allocation5 + $0x40] sm:$0xff]
        %v184 = vld [vmem:[#allocation5 + $0x48] sm:$0xff]
        %v185 = vld [vmem:[#allocation5 + $0x50] sm:$0xff]
        %v186 = vld [vmem:[#allocation5 + $0x58] sm:$0xff]
        %v187 = vld [vmem:[#allocation5 + $0x60] sm:$0xff]
        %v188 = vld [vmem:[#allocation5 + $0x68] sm:$0xff]
        %v189 = vld [vmem:[#allocation5 + $0x70] sm:$0xff]
        %v190 = vld [vmem:[#allocation5 + $0x78] sm:$0xff]
        %191 = vmatprep.subr.mxu0 0.0
        %192 = vmatpush1.msra.mxu0 %v175
        %193 = vmatprep.subr.mxu0 0.0
        %194 = vmatpush1.msra.mxu0 %v176
        %195 = vmatprep.subr.mxu0 0.0
        %196 = vmatpush1.msra.mxu0 %v177
        %197 = vmatprep.subr.mxu0 0.0
        %198 = vmatpush1.msra.mxu0 %v178
        %199 = vmatprep.subr.mxu0 0.0
        %200 = vmatpush1.msra.mxu0 %v179
        %201 = vmatprep.subr.mxu0 0.0
        %202 = vmatpush1.msra.mxu0 %v180
        %203 = vmatprep.subr.mxu0 0.0
        %204 = vmatpush1.msra.mxu0 %v181
        %205 = vmatprep.subr.mxu0 0.0
        %206 = vmatpush1.msra.mxu0 %v182
        %207 = vmatprep.subr.mxu0 0.0
        %208 = vmatpush1.msra.mxu0 %v183
        %209 = vmatprep.subr.mxu0 0.0
        %210 = vmatpush1.msra.mxu0 %v184
        %211 = vmatprep.subr.mxu0 0.0
        %212 = vmatpush1.msra.mxu0 %v185
        %213 = vmatprep.subr.mxu0 0.0
        %214 = vmatpush1.msra.mxu0 %v186
        %215 = vmatprep.subr.mxu0 0.0
        %216 = vmatpush1.msra.mxu0 %v187
        %217 = vmatprep.subr.mxu0 0.0
        %218 = vmatpush1.msra.mxu0 %v188
        %219 = vmatprep.subr.mxu0 0.0
        %220 = vmatpush1.msra.mxu0 %v189
        %221 = vmatprep.subr.mxu0 0.0
        %222 = vmatpush1.msra.mxu0 %v190
        %223 = vmatprep.subr.mxu0 0.0
        %224 = vmatpush1.msra.mxu0 0.0
        %225 = vmatprep.subr.mxu0 0.0
        %226 = vmatpush1.msra.mxu0 0.0
        %227 = vmatprep.subr.mxu0 0.0
        %228 = vmatpush1.msra.mxu0 0.0
        %229 = vmatprep.subr.mxu0 0.0
        %230 = vmatpush1.msra.mxu0 0.0
        %231 = vmatprep.subr.mxu0 0.0
        %232 = vmatpush1.msra.mxu0 0.0
        %233 = vmatprep.subr.mxu0 0.0
        %234 = vmatpush1.msra.mxu0 0.0
        %235 = vmatprep.subr.mxu0 0.0
        %236 = vmatpush1.msra.mxu0 0.0
        %237 = vmatprep.subr.mxu0 0.0
        %238 = vmatpush1.msra.mxu0 0.0
        %239 = vmatprep.subr.mxu0 0.0
        %240 = vmatpush1.msra.mxu0 0.0
        %241 = vmatprep.subr.mxu0 0.0
        %242 = vmatpush1.msra.mxu0 0.0
        %243 = vmatprep.subr.mxu0 0.0
        %244 = vmatpush1.msra.mxu0 0.0
        %245 = vmatprep.subr.mxu0 0.0
        %246 = vmatpush1.msra.mxu0 0.0
        %247 = vmatprep.subr.mxu0 0.0
        %248 = vmatpush1.msra.mxu0 0.0
        %249 = vmatprep.subr.mxu0 0.0
        %250 = vmatpush1.msra.mxu0 0.0
        %251 = vmatprep.subr.mxu0 0.0
        %252 = vmatpush1.msra.mxu0 0.0
        %253 = vmatprep.subr.mxu0 0.0
        %254 = vmatpush1.msra.mxu0 0.0
        %255 = vmatprep.mubr.f32.mxu0 0.0
        %256 = vmatmul.mubr.f32.gmra.mrb[0].mxu0 %v174
        %v257 = vpop.f32.mrb[0].mxu0
        %v258 = vadd.f32 0.0, %v257
        %v259 = vpop.f32.mrb[0].mxu0
        %260 = vdwg.mxu0
        %261 = vst [vmem:[%s173] sm:$0xff] %v258
        %s262 = sand.u32 %s75, 1
        %s263 = scalar_lea.sflag [#allocation4], %s262
        %s264 = sand.u32 %s75, 1
        %s265 = smul.addr %s264, 8
        %s266 = scalar_lea.vmem [#allocation7], %s265
        // Predicated region
        $region37: #{tpu_custom_call.1} parent=27 // pred_check
          %p267 = pneg %p85
        $region38: #{tpu_custom_call.1} parent=27 // pred_check_branch
          %269 = sbr.rel (%p267) target = $region40
        $region39: #{tpu_custom_call.1} parent=27 // pred_region
          %s271 = ssub.s32 128, 128
          %272 = vsyncadd %s263, %s271
          %s273 = smul.addr %s20, 128
          %s274 = scalar_lea.hbm %s2, %s273
          %s276 = sshll.u32 %s266, 4
          %s277 = int_to_ptr.vmem [resolvable:$true] %s276
          %279 = dma.vmem_to_hbm [thread:$0]  %s277, 128, %s274, %s263
        $region40: #{tpu_custom_call.1} parent=27 // pred_fallthru
          _
      $region28: #{tpu_custom_call.1} parent=5 // pred_fallthru
        _
      %p280 = scmp.le.s32.totalorder 2, %s15
      // Predicated region
      $region41: #{tpu_custom_call.1} parent=5 // pred_check
        %p281 = pneg %p280
      $region42: #{tpu_custom_call.1} parent=5 // pred_check_branch
        %283 = sbr.rel (%p281) target = $region44
      $region43: #{tpu_custom_call.1} parent=5 // pred_region
        %s284 = ssub.s32 %s15, 2
        // Predicated region
        $region45: #{tpu_custom_call.1} parent=43 // pred_check
          %p285 = pneg %p91
        $region46: #{tpu_custom_call.1} parent=43 // pred_check_branch
          %287 = sbr.rel (%p285) target = $region48
        $region47: #{tpu_custom_call.1} parent=43 // pred_region
          %s288 = sand.u32 %s76, 1
          %s289 = scalar_lea.sflag [#allocation4], %s288
          %s290 = sand.u32 %s76, 1
          %s291 = smul.addr %s290, 8
          %s292 = scalar_lea.vmem [#allocation7], %s291
          %293 = dma.done %s289, 128
        $region48: #{tpu_custom_call.1} parent=43 // pred_fallthru
          _
      $region44: #{tpu_custom_call.1} parent=5 // pred_fallthru
        _
    $region6: #{tpu_custom_call.1} parent=1 // loop_footer
      %s19 = sadd.s32 1, %s15
    $region7: #{tpu_custom_call.1} parent=1 // loop_footer_branch
      %14 = sbr.rel target = $region3
    $region8: #{tpu_custom_call.1} parent=1 // loop_exit
      _
    %294 = vsyncpa [#allocation3], 1
    %s295 = scalar_lea.sflag [#allocation3], 1
    %296 = vsyncpa %s295, 1
    %297 = vsyncpa [#allocation6], 1
    %298 = vsyncpa [#allocation4], 1
    %s299 = scalar_lea.sflag [#allocation4], 1
    %300 = vsyncpa %s299, 1

</llo_original>
